<compile_context>
chip_gen: v7x
topology: tpu7x:2x2x1
jax: 0.10.0
libtpu: 0.0.40
codegen_flags: <defaults>
</compile_context>

<pallas_src>
import jax
import jax.numpy as jnp
from jax.experimental import pallas as pl
from jax.experimental.pallas import tpu as pltpu  # noqa: F401  (kept for parity)

F_IN = 2          # ODE state dim (input features)
F_OUT = 2         # ODE state dim (output features)
HIDDEN = 50       # logical hidden size of the MLP
H_PAD = 64        # hidden size padded for clean lane layout
LANES = 128

# Packed-parameter slab layout: one [8, 128] f32 buffer.
ROW_W1 = 0        # rows 0:2 -> w1    [2, HIDDEN]   (lanes 0:HIDDEN)
ROW_B1 = 2        # row  2   -> b1    [HIDDEN]
ROW_W2T = 3       # rows 3:5 -> w2^T  [2, HIDDEN]   (w2 stored transposed)
ROW_B2 = 5        # row  5   -> b2    [F_OUT]       (lanes 0:2)
SLAB_ROWS = 8


def pack_params(w1, b1, w2, b2):
    """Pack (w1[2,50], b1[50], w2[50,2], b2[2]) into one [8,128] f32 slab."""
    h = w1.shape[1]
    p = jnp.zeros((SLAB_ROWS, LANES), jnp.float32)
    p = p.at[ROW_W1:ROW_W1 + F_IN, :h].set(w1.astype(jnp.float32))
    p = p.at[ROW_B1, :h].set(b1.astype(jnp.float32))
    p = p.at[ROW_W2T:ROW_W2T + F_OUT, :h].set(w2.astype(jnp.float32).T)
    p = p.at[ROW_B2, :F_OUT].set(b2.astype(jnp.float32))
    return p


def _load_params(p_ref):
    """Load all parameters from the packed slab once (hoisted out of loops)."""
    w1r0 = p_ref[ROW_W1:ROW_W1 + 1, :H_PAD]        # [1, 64]
    w1r1 = p_ref[ROW_W1 + 1:ROW_W1 + 2, :H_PAD]    # [1, 64]
    b1 = p_ref[ROW_B1:ROW_B1 + 1, :H_PAD]          # [1, 64]
    w2t0 = p_ref[ROW_W2T:ROW_W2T + 1, :H_PAD]      # [1, 64]
    w2t1 = p_ref[ROW_W2T + 1:ROW_W2T + 2, :H_PAD]  # [1, 64]
    b2 = p_ref[ROW_B2:ROW_B2 + 1, :F_OUT]          # [1, 2]
    return w1r0, w1r1, b1, w2t0, w2t1, b2


def _mlp_eval(y, params):
    """tanh(y @ W1 + b1) @ W2 + b2 on VPU/EUP/XLU only (no MXU).

    Padded hidden lanes (50:64) are zero in w1/b1/w2^T, so they contribute
    exactly zero (tanh(0)=0 and zero w2 lanes).
    """
    w1r0, w1r1, b1, w2t0, w2t1, b2 = params
    # K=2 first layer as a VPU outer-product.
    h = jnp.tanh(y[:, 0:1] * w1r0 + y[:, 1:2] * w1r1 + b1)      # [B, 64]
    # N=2 second layer as two lane-reductions (XLU), no MXU pass.
    s0 = jnp.sum(h * w2t0, axis=-1, keepdims=True)              # [B, 1]
    s1 = jnp.sum(h * w2t1, axis=-1, keepdims=True)              # [B, 1]
    return jnp.concatenate([s0, s1], axis=-1) + b2              # [B, 2]


def odefunc_kernel(y_ref, p_ref, o_ref):
    y = y_ref[...].astype(jnp.float32)
    out = _mlp_eval(y, _load_params(p_ref))
    o_ref[...] = out.astype(o_ref.dtype)


def odefunc_forward(t, y, params):
    """Pallas implementation of ODEFunc.forward(t, y). `t` is unused (matches
    the reference module)."""
    del t
    B, f_in = y.shape
    full = lambda shape: pl.BlockSpec(shape, lambda: (0,) * len(shape))
    return pl.pallas_call(
        odefunc_kernel,
        out_shape=jax.ShapeDtypeStruct((B, F_OUT), y.dtype),
        grid=(),
        in_specs=[full((B, f_in)), full(params.shape)],
        out_specs=full((B, F_OUT)),
    )(y, params)


def odefunc_integrate(y0, w1, b1, w2, b2, *, num_steps, dt):
    """Fused explicit-Euler integration in a single grid=() pallas_call.

    dt is pre-folded into W2/b2 at pack time (y_next = y + tanh(y@W1+b1)@(dt*W2)
    + dt*b2), so the kernel closes over no scalar constants. The Euler loop is
    an in-kernel fori_loop with unroll=True carrying the state in registers;
    HBM is touched only once on the way in and once on the way out.
    """
    B, f_in = y0.shape
    params_dt = pack_params(w1, b1, dt * w2, dt * b2)

    def kernel(y0_ref, p_ref, yT_ref):
        params = _load_params(p_ref)
        y_init = y0_ref[...].astype(jnp.float32)

        def body(_, y):
            return y + _mlp_eval(y, params)

        yT = jax.lax.fori_loop(0, num_steps, body, y_init, unroll=True)
        yT_ref[...] = yT.astype(yT_ref.dtype)

    full = lambda shape: pl.BlockSpec(shape, lambda: (0,) * len(shape))
    return pl.pallas_call(
        kernel,
        out_shape=jax.ShapeDtypeStruct((B, F_OUT), y0.dtype),
        grid=(),
        in_specs=[full((B, f_in)), full(params_dt.shape)],
        out_specs=full((B, F_OUT)),
    )(y0, params_dt)


def init_params(key, f_in=F_IN, hidden=HIDDEN, f_out=F_OUT):
    """Init matching the module: weights ~ N(0, 0.1), biases = 0. Weights are
    stored as [in, out] (transposed vs. PyTorch's [out, in])."""
    k1, k2 = jax.random.split(key)
    w1 = (0.1 * jax.random.normal(k1, (f_in, hidden))).astype(jnp.float32)
    b1 = jnp.zeros((hidden,), jnp.float32)
    w2 = (0.1 * jax.random.normal(k2, (hidden, f_out))).astype(jnp.float32)
    b2 = jnp.zeros((f_out,), jnp.float32)
    return w1, b1, w2, b2


if __name__ == "__main__":
    key = jax.random.PRNGKey(0)
    kp, ky = jax.random.split(key)

    w1, b1, w2, b2 = init_params(kp)
    params = pack_params(w1, b1, w2, b2)

    # Batch of 8 ODE states of dimension 2.
    B = 8
    y = jax.random.normal(ky, (B, F_IN), jnp.float32)
    t = jnp.float32(0.0)  # unused by forward, kept for signature parity

    # --- single forward pass (matches ODEFunc.forward) ---
    out = odefunc_forward(t, y, params)
    out = jax.block_until_ready(out)
    ref = jnp.tanh(y @ w1 + b1) @ w2 + b2
    assert out.shape == (B, F_OUT)
    assert jnp.allclose(out, ref, atol=1e-5, rtol=1e-5)

    # --- fused multi-step Euler integration (many evals, one pallas_call) ---
    num_steps, dt = 32, 0.05
    yT = odefunc_integrate(y, w1, b1, w2, b2, num_steps=num_steps, dt=dt)
    yT = jax.block_until_ready(yT)

    def euler_ref(y0):
        def body(yc, _):
            dyc = jnp.tanh(yc @ w1 + b1) @ w2 + b2
            return yc + dt * dyc, None
        yf, _ = jax.lax.scan(body, y0, None, length=num_steps)
        return yf

    yT_ref = euler_ref(y)
    assert jnp.allclose(yT, yT_ref, atol=1e-4, rtol=1e-4)

    print("KERNEL_OK")
</pallas_src>

<mosaic_0001>
module attributes {stable_mosaic.version = 11 : i64} {
  func.func @odefunc_kernel(%arg0: memref<8x2xf32, #tpu.memory_space<vmem>>, %arg1: memref<8x128xf32, #tpu.memory_space<vmem>>, %arg2: memref<8x2xf32, #tpu.memory_space<vmem>>) attributes {dimension_semantics = [], scalar_prefetch = 0 : i64, scratch_operands = 0 : i64, tpu.core_type = #tpu.core_type<tc>} {
    %c0 = arith.constant 0 : index
    %c0_0 = arith.constant 0 : index
    %0 = vector.load %arg0[%c0, %c0_0] : memref<8x2xf32, #tpu.memory_space<vmem>>, vector<8x2xf32>
    %c0_1 = arith.constant 0 : index
    %c0_2 = arith.constant 0 : index
    %1 = vector.load %arg1[%c0_1, %c0_2] : memref<8x128xf32, #tpu.memory_space<vmem>>, vector<1x64xf32>
    %c1 = arith.constant 1 : index
    %c0_3 = arith.constant 0 : index
    %2 = vector.load %arg1[%c1, %c0_3] : memref<8x128xf32, #tpu.memory_space<vmem>>, vector<1x64xf32>
    %c2 = arith.constant 2 : index
    %c0_4 = arith.constant 0 : index
    %3 = vector.load %arg1[%c2, %c0_4] : memref<8x128xf32, #tpu.memory_space<vmem>>, vector<1x64xf32>
    %c3 = arith.constant 3 : index
    %c0_5 = arith.constant 0 : index
    %4 = vector.load %arg1[%c3, %c0_5] : memref<8x128xf32, #tpu.memory_space<vmem>>, vector<1x64xf32>
    %c4 = arith.constant 4 : index
    %c0_6 = arith.constant 0 : index
    %5 = vector.load %arg1[%c4, %c0_6] : memref<8x128xf32, #tpu.memory_space<vmem>>, vector<1x64xf32>
    %c5 = arith.constant 5 : index
    %c0_7 = arith.constant 0 : index
    %6 = vector.load %arg1[%c5, %c0_7] : memref<8x128xf32, #tpu.memory_space<vmem>>, vector<1x2xf32>
    %7 = vector.extract_strided_slice %0 {offsets = [0, 0], sizes = [8, 1], strides = [1, 1]} : vector<8x2xf32> to vector<8x1xf32>
    %8 = vector.broadcast %7 : vector<8x1xf32> to vector<8x64xf32>
    %9 = vector.broadcast %1 : vector<1x64xf32> to vector<8x64xf32>
    %10 = arith.mulf %8, %9 : vector<8x64xf32>
    %11 = vector.extract_strided_slice %0 {offsets = [0, 1], sizes = [8, 1], strides = [1, 1]} : vector<8x2xf32> to vector<8x1xf32>
    %12 = vector.broadcast %11 : vector<8x1xf32> to vector<8x64xf32>
    %13 = vector.broadcast %2 : vector<1x64xf32> to vector<8x64xf32>
    %14 = arith.mulf %12, %13 : vector<8x64xf32>
    %15 = arith.addf %10, %14 : vector<8x64xf32>
    %16 = vector.broadcast %3 : vector<1x64xf32> to vector<8x64xf32>
    %17 = arith.addf %15, %16 : vector<8x64xf32>
    %18 = math.tanh %17 : vector<8x64xf32>
    %19 = vector.broadcast %4 : vector<1x64xf32> to vector<8x64xf32>
    %20 = arith.mulf %18, %19 : vector<8x64xf32>
    %cst = arith.constant dense<0.000000e+00> : vector<8xf32>
    %21 = vector.multi_reduction <add>, %20, %cst [1] : vector<8x64xf32> to vector<8xf32>
    %22 = vector.shape_cast %21 : vector<8xf32> to vector<8x1xf32>
    %23 = vector.broadcast %5 : vector<1x64xf32> to vector<8x64xf32>
    %24 = arith.mulf %18, %23 : vector<8x64xf32>
    %cst_8 = arith.constant dense<0.000000e+00> : vector<8xf32>
    %25 = vector.multi_reduction <add>, %24, %cst_8 [1] : vector<8x64xf32> to vector<8xf32>
    %26 = vector.shape_cast %25 : vector<8xf32> to vector<8x1xf32>
    %27 = tpu.concatenate %22, %26 in 1 : vector<8x1xf32>, vector<8x1xf32> -> vector<8x2xf32>
    %28 = vector.broadcast %6 : vector<1x2xf32> to vector<8x2xf32>
    %29 = arith.addf %27, %28 : vector<8x2xf32>
    %c0_9 = arith.constant 0 : index
    %c0_10 = arith.constant 0 : index
    %30 = vector.load %arg2[%c0_9, %c0_10] : memref<8x2xf32, #tpu.memory_space<vmem>>, vector<8x2xf32>
    tpu.vector_store %arg2[%c0_9, %c0_10], %29 {strides = array<i32>} : memref<8x2xf32, #tpu.memory_space<vmem>>, vector<8x2xf32>,
    return
  }
}

</mosaic_0001>

<llo_original>
// kernel: tpu_custom_call.1
$region0: #{tpu_custom_call.1}
  #allocation0 [shape = 'u32[]', space=smem, size = 0x4, offset = 0x4, fixed_abs, tag = 'smem constant byte address 0x4 - core index']
  #allocation1 [shape = 'u32[144,128]{1,0:T(1,128)}', space=vmem, size = 0x12000, scoped, tag = 'internal scratch']
  %s0 = inlined_call_operand.vmem [shape: f32[8,2], index: 0, kind: input, shape index: {}]
  %s1 = inlined_call_operand.vmem [shape: f32[8,128], index: 1, kind: input, shape index: {}]
  %s2 = inlined_call_operand.vmem [shape: f32[8,2], index: 2, kind: output, shape index: {}]
  %s3 = sld [smem:[#allocation0]]
  $region18: #{tpu_custom_call.1} parent=0
    _
  %s5 = ssub.s32 1, %s3
  %s6 = scalar_select 0, %s5, %s3
  // Predicated region
  $region2: #{tpu_custom_call.1} parent=0 // pred_check
    _
  $region3: #{tpu_custom_call.1} parent=0 // pred_check_branch
    %8 = sbr.rel (0) target = $region5
  $region4: #{tpu_custom_call.1} parent=0 // pred_region
    _
  $region5: #{tpu_custom_call.1} parent=0 // pred_fallthru
    _
  // Predicated region
  $region6: #{tpu_custom_call.1} parent=0 // pred_check
    _
  $region7: #{tpu_custom_call.1} parent=0 // pred_check_branch
    %10 = sbr.rel (0) target = $region9
  $region8: #{tpu_custom_call.1} parent=0 // pred_region
    _
  $region9: #{tpu_custom_call.1} parent=0 // pred_fallthru
    _
  %v11 = vld [vmem:[%s0] sm:$0xff]
  %v12 = vld [vmem:[%s1] sm:$0x1]
  %v13 = vld [vmem:[%s1 + $0x1] sm:$0x1]
  %v14 = vld [vmem:[%s1 + $0x2] sm:$0x1]
  %v15 = vld [vmem:[%s1 + $0x3] sm:$0x1]
  %v16 = vld [vmem:[%s1 + $0x4] sm:$0x1]
  %v17 = vld [vmem:[%s1 + $0x5] sm:$0x1]
  %19 = vset.pattern.permute.xlu0 0
  %20 = vperm.xlu0 %19, %v11
  %v21 = vpop.permute.xlu0 %20
  %v23 = vlaneseq
  %v24 = vshrl.u32 %v23, 7
  %v25 = vsub.s32 0, %v24
  %v26 = vrot.slane %v12, %v25
  %v27 = vmul.f32 %v21, %v26
  %28 = vset.pattern.permute.xlu0 1
  %29 = vperm.xlu0 %28, %v11
  %v30 = vpop.permute.xlu0 %29
  %v32 = vlaneseq
  %v33 = vshrl.u32 %v32, 7
  %v34 = vsub.s32 0, %v33
  %v35 = vrot.slane %v13, %v34
  %v36 = vmul.f32 %v30, %v35
  %v37 = vadd.f32 %v27, %v36
  %v38 = vlaneseq
  %v39 = vshrl.u32 %v38, 7
  %v40 = vsub.s32 0, %v39
  %v41 = vrot.slane %v14, %v40
  %v42 = vadd.f32 %v37, %v41
  %v43 = vtanh.pop %v42
  %v44 = vlaneseq
  %v45 = vshrl.u32 %v44, 7
  %v46 = vsub.s32 0, %v45
  %v47 = vrot.slane %v15, %v46
  %v48 = vmul.f32 %v43, %v47
  %vm49 = vcmask 523264
  %v50 = vsel %vm49, %v48, 0.0
  %51 = vadd.xlane.f32.xlu0 %v50
  %v52 = vpop.xlane.xlu0 %51
  %v53 = vlaneseq
  %v54 = vshrl.u32 %v53, 7
  %v55 = vsub.s32 0, %v54
  %v56 = vrot.slane %v16, %v55
  %v57 = vmul.f32 %v43, %v56
  %v58 = vsel %vm49, %v57, 0.0
  %59 = vadd.xlane.f32.xlu0 %v58
  %v60 = vpop.xlane.xlu0 %59
  %vm61 = vcmask 7168
  %v62 = vsel %vm61, %v52, %v60
  %v63 = vlaneseq
  %v64 = vshrl.u32 %v63, 7
  %v65 = vsub.s32 0, %v64
  %v66 = vrot.slane %v17, %v65
  %v67 = vadd.f32 %v62, %v66
  %vm68 = vcmask 15360
  %69 = vst.msk [vmem:[%s2] sm:$0xff] %vm68, %v67
  // Predicated region
  $region10: #{tpu_custom_call.1} parent=0 // pred_check
    _
  $region11: #{tpu_custom_call.1} parent=0 // pred_check_branch
    %71 = sbr.rel (0) target = $region13
  $region12: #{tpu_custom_call.1} parent=0 // pred_region
    _
  $region13: #{tpu_custom_call.1} parent=0 // pred_fallthru
    _
  // Predicated region
  $region14: #{tpu_custom_call.1} parent=0 // pred_check
    _
  $region15: #{tpu_custom_call.1} parent=0 // pred_check_branch
    %73 = sbr.rel (0) target = $region17
  $region16: #{tpu_custom_call.1} parent=0 // pred_region
    _
  $region17: #{tpu_custom_call.1} parent=0 // pred_fallthru
    _

</llo_original>
